<compile_context>
chip_gen: v5e
topology: v5e:2x2
jax: 0.10.0
libtpu: 0.0.40
codegen_flags: <defaults>
</compile_context>

<pallas_src>
import functools

import jax
import jax.numpy as jnp
import numpy as np
from jax import lax
from jax.experimental import pallas as pl
from jax.experimental.pallas import tpu as pltpu

LN_EPS = 1e-5  # PyTorch nn.LayerNorm default eps


# ----------------------------- Pallas kernel -------------------------------

def _fused_router_kernel(p1_ref, p2_ref, g_ref, g1_ref, b1_ref, g2_ref,
                         b2_ref, wd_ref, bd_ref, out_ref, w1_ref, *, inv_c):
    """Fused LayerNorm(p1), LayerNorm(p2), logit, softmax, weighted sum.

    p1_ref/p2_ref: (TM, D) patch-token rows, token layout (c ph pw).
    g_ref:  (D, D) 0/1 matrix; G[i,j] = 1 iff token elements i and j belong to
            the same pixel (i % (ph*pw) == j % (ph*pw)).  x @ G broadcasts the
            per-pixel channel sum back onto every channel lane (MXU).
    g1/b1/g2/b2_ref: (1, D) LayerNorm affine params expanded per lane.
    wd_ref: (1, D) routing row = (W[:,1]-W[:,0]) * 0.5 / sqrt(D).
    bd_ref: (1,) SMEM scalar = (b[1]-b[0]) / sqrt(D).
    """
    p1 = p1_ref[...].astype(jnp.float32)                     # (TM, D)
    p2 = p2_ref[...].astype(jnp.float32)
    G = g_ref[...]                                           # (D, D)

    def layernorm(x, gamma, beta):
        mean = jnp.dot(x, G, preferred_element_type=jnp.float32) * inv_c
        xc = x - mean
        var = jnp.dot(xc * xc, G, preferred_element_type=jnp.float32) * inv_c
        return xc * lax.rsqrt(var + LN_EPS) * gamma + beta

    p1n = layernorm(p1, g1_ref[...], b1_ref[...])
    p2n = layernorm(p2, g2_ref[...], b2_ref[...])

    # softmax over two logits == sigmoid of the logit difference; the 0.5 and
    # 1/sqrt(D) factors are pre-folded into wd_ref / bd_ref in the wrapper.
    delta = jnp.sum((p1n + p2n) * wd_ref[...], axis=-1, keepdims=True)
    w1 = 1.0 / (1.0 + jnp.exp(-(delta + bd_ref[0])))          # (TM, 1)

    out_ref[...] = (p1n + w1 * (p2n - p1n)).astype(out_ref.dtype)
    w1_ref[...] = w1.astype(w1_ref.dtype)


def _pick_tile_rows(rows, d, *, cap_rows=1024, vmem_budget=8 * 1024 * 1024):
    """Largest legal row tile: multiple of 8 dividing `rows`, or full rows."""
    cap = max(8, vmem_budget // (6 * d * 4))   # 3 f32 streams, double-buffered
    cap = min(cap, cap_rows, rows)
    if rows % 8 != 0:
        return rows                            # full-extent block (always legal)
    cand = (cap // 8) * 8
    while cand >= 8:
        if rows % cand == 0:
            return cand
        cand -= 8
    return rows


def fused_route(t1, t2, G, g1, b1, g2, b2, w_diff, b_diff, *, inv_c):
    """t1, t2: (BN, D) patch tokens.  Returns (routed (BN, D), w1 (BN, 1))."""
    BN, D = t1.shape
    tile_rows = _pick_tile_rows(BN, D)
    grid = BN // tile_rows

    row_in = pl.BlockSpec((tile_rows, D), lambda i: (i, 0))
    const = pl.BlockSpec((1, D), lambda i: (0, 0))
    kernel = functools.partial(_fused_router_kernel, inv_c=inv_c)

    return pl.pallas_call(
        kernel,
        out_shape=(
            jax.ShapeDtypeStruct((BN, D), t1.dtype),
            jax.ShapeDtypeStruct((BN, 1), jnp.float32),
        ),
        grid_spec=pltpu.PrefetchScalarGridSpec(
            num_scalar_prefetch=0,
            grid=(grid,),
            in_specs=[
                row_in,                                    # p1 tokens
                row_in,                                    # p2 tokens
                pl.BlockSpec((D, D), lambda i: (0, 0)),    # pixel-group matrix
                const, const, const, const,                # gamma1/beta1/gamma2/beta2
                const,                                     # w_diff
                pl.BlockSpec(memory_space=pltpu.MemorySpace.SMEM),  # b_diff
            ],
            out_specs=(
                pl.BlockSpec((tile_rows, D), lambda i: (i, 0)),
                pl.BlockSpec((tile_rows, 1), lambda i: (i, 0)),
            ),
        ),
        compiler_params=pltpu.CompilerParams(
            dimension_semantics=("parallel",),
            vmem_limit_bytes=32 * 1024 * 1024,
        ),
    )(t1, t2, G, g1, b1, g2, b2, w_diff, b_diff)


# ------------------------------- JAX glue ----------------------------------

def _to_patch_tokens(x, ph, pw):
    # rearrange('b c (h ph) (w pw) -> b (h w) (c ph pw)')
    B, C, H, W = x.shape
    h, w = H // ph, W // pw
    x = x.reshape(B, C, h, ph, w, pw)
    x = jnp.transpose(x, (0, 2, 4, 1, 3, 5))   # b h w c ph pw
    return x.reshape(B, h * w, C * ph * pw)


def _from_patch_tokens(x, C, H, W, ph, pw):
    # rearrange('b (h w) (c ph pw) -> b c (h ph) (w pw)')
    B, N, D = x.shape
    h, w = H // ph, W // pw
    x = x.reshape(B, h, w, C, ph, pw)
    x = jnp.transpose(x, (0, 3, 1, 4, 2, 5))   # b c h ph w pw
    return x.reshape(B, C, H, W)


def patch_router(p1, p2, params, patch_size, temp=0.1):
    """Forward pass of PatchRouter.  p1, p2: (B, C, H, W), C == embed_dim.

    Returns (out: (B, C, H, W), weights: (B, N, 2)).  `temp` is unused,
    matching the reference forward (which scales by D**0.5, not temp).
    """
    del temp
    B, C, H, W = p1.shape
    ph = pw = patch_size
    h, w = H // ph, W // pw
    N = h * w
    P = ph * pw
    D = C * P
    f32 = jnp.float32

    # One rearrange per input stream (reference (c ph pw) token ordering).
    t1 = _to_patch_tokens(p1, ph, pw).reshape(B * N, D)
    t2 = _to_patch_tokens(p2, ph, pw).reshape(B * N, D)

    # Trace-time constants: fold 0.5 and 1/sqrt(D) into the routing weights,
    # expand LN affine params to per-lane rows, build the pixel-group matrix.
    inv_scale = 1.0 / float(D) ** 0.5
    g1 = jnp.repeat(params["gamma1"].astype(f32), P).reshape(1, D)
    b1 = jnp.repeat(params["beta1"].astype(f32), P).reshape(1, D)
    g2 = jnp.repeat(params["gamma2"].astype(f32), P).reshape(1, D)
    b2 = jnp.repeat(params["beta2"].astype(f32), P).reshape(1, D)
    w_diff = ((params["w_logit"][:, 1] - params["w_logit"][:, 0]).astype(f32)
              * (0.5 * inv_scale)).reshape(1, D)
    b_diff = ((params["b_logit"][1] - params["b_logit"][0]).astype(f32)
              * inv_scale).reshape(1)
    idx = jnp.arange(D, dtype=jnp.int32)
    G = (idx[:, None] % P == idx[None, :] % P).astype(f32)

    routed, w1 = fused_route(t1, t2, G, g1, b1, g2, b2, w_diff, b_diff,
                             inv_c=1.0 / float(C))

    out = _from_patch_tokens(routed.reshape(B, N, D), C, H, W, ph, pw)
    w1 = w1.astype(f32)
    weights = jnp.concatenate([1.0 - w1, w1], axis=-1).reshape(B, N, 2)
    return out, weights


# ------------------------- pure-JAX reference ------------------------------

def patch_router_ref(p1, p2, params, patch_size):
    B, C, H, W = p1.shape
    ph = pw = patch_size

    def ln(x, g, b):
        xt = jnp.transpose(x, (0, 2, 3, 1))
        mean = jnp.mean(xt, axis=-1, keepdims=True)
        var = jnp.mean((xt - mean) ** 2, axis=-1, keepdims=True)
        y = (xt - mean) / jnp.sqrt(var + LN_EPS) * g + b
        return jnp.transpose(y, (0, 3, 1, 2))

    p1n = ln(p1, params["gamma1"], params["beta1"])
    p2n = ln(p2, params["gamma2"], params["beta2"])
    t1 = _to_patch_tokens(p1n, ph, pw)
    t2 = _to_patch_tokens(p2n, ph, pw)
    _, N, D = t1.shape
    x = 0.5 * (t1 + t2)
    logits = x @ params["w_logit"] + params["b_logit"]
    weights = jax.nn.softmax(logits / (D ** 0.5), axis=-1)
    routed = weights[..., 0:1] * t1 + weights[..., 1:2] * t2
    out = _from_patch_tokens(routed, C, H, W, ph, pw)
    return out, weights


# --------------------------------- main -------------------------------------

if __name__ == "__main__":
    # Small shapes consistent with the module: embed_dim = C = 8, patch_size=4
    # -> N = (H/4)*(W/4) = 4 patches per image, D = C*ph*pw = 128.
    B, C, H, W = 2, 8, 8, 8
    patch_size = 4
    D = C * patch_size * patch_size

    key = jax.random.PRNGKey(0)
    keys = jax.random.split(key, 8)
    p1 = jax.random.normal(keys[0], (B, C, H, W), jnp.float32)
    p2 = jax.random.normal(keys[1], (B, C, H, W), jnp.float32)
    params = {
        "gamma1": 1.0 + 0.1 * jax.random.normal(keys[2], (C,), jnp.float32),
        "beta1": 0.1 * jax.random.normal(keys[3], (C,), jnp.float32),
        "gamma2": 1.0 + 0.1 * jax.random.normal(keys[4], (C,), jnp.float32),
        "beta2": 0.1 * jax.random.normal(keys[5], (C,), jnp.float32),
        # PyTorch Linear(D, 2) stores weight as (2, D); we keep it transposed
        # as (D, 2) so x @ w + b == x @ weight.T + bias.
        "w_logit": 0.05 * jax.random.normal(keys[6], (D, 2), jnp.float32),
        "b_logit": 0.05 * jax.random.normal(keys[7], (2,), jnp.float32),
    }

    out, weights = patch_router(p1, p2, params, patch_size)
    jax.block_until_ready((out, weights))

    out_ref, weights_ref = patch_router_ref(p1, p2, params, patch_size)
    np.testing.assert_allclose(np.asarray(out), np.asarray(out_ref),
                               atol=5e-2, rtol=5e-2)
    np.testing.assert_allclose(np.asarray(weights), np.asarray(weights_ref),
                               atol=5e-2, rtol=5e-2)
    print("KERNEL_OK")
</pallas_src>

<mosaic_0001>
module attributes {stable_mosaic.version = 11 : i64} {
  func.func @_fused_router_kernel(%arg0: i32, %arg1: memref<8x128xf32, #tpu.memory_space<vmem>>, %arg2: memref<8x128xf32, #tpu.memory_space<vmem>>, %arg3: memref<128x128xf32, #tpu.memory_space<vmem>>, %arg4: memref<1x128xf32, #tpu.memory_space<vmem>>, %arg5: memref<1x128xf32, #tpu.memory_space<vmem>>, %arg6: memref<1x128xf32, #tpu.memory_space<vmem>>, %arg7: memref<1x128xf32, #tpu.memory_space<vmem>>, %arg8: memref<1x128xf32, #tpu.memory_space<vmem>>, %arg9: memref<1xf32, #tpu.memory_space<smem>>, %arg10: memref<8x128xf32, #tpu.memory_space<vmem>>, %arg11: memref<8x1xf32, #tpu.memory_space<vmem>>) attributes {dimension_semantics = [#tpu.dimension_semantics<parallel>], iteration_bounds = array<i64: 1>, scalar_prefetch = 0 : i64, scratch_operands = 0 : i64, tpu.core_type = #tpu.core_type<tc>, window_params = [{transform_indices = @transform_0, window_bounds = array<i64: 8, 128>}, {transform_indices = @transform_1, window_bounds = array<i64: 8, 128>}, {pipeline_mode = #tpu.pipeline_mode<synchronous>, transform_indices = @transform_2, window_bounds = array<i64: 128, 128>}, {pipeline_mode = #tpu.pipeline_mode<synchronous>, transform_indices = @transform_3, window_bounds = array<i64: 1, 128>}, {pipeline_mode = #tpu.pipeline_mode<synchronous>, transform_indices = @transform_4, window_bounds = array<i64: 1, 128>}, {pipeline_mode = #tpu.pipeline_mode<synchronous>, transform_indices = @transform_5, window_bounds = array<i64: 1, 128>}, {pipeline_mode = #tpu.pipeline_mode<synchronous>, transform_indices = @transform_6, window_bounds = array<i64: 1, 128>}, {pipeline_mode = #tpu.pipeline_mode<synchronous>, transform_indices = @transform_7, window_bounds = array<i64: 1, 128>}, {transform_indices = @transform_8, window_bounds = array<i64: 1>}, {transform_indices = @transform_9, window_bounds = array<i64: 8, 128>}, {transform_indices = @transform_10, window_bounds = array<i64: 8, 1>}]} {
    %c0 = arith.constant 0 : index
    %c0_0 = arith.constant 0 : index
    %0 = vector.load %arg1[%c0, %c0_0] : memref<8x128xf32, #tpu.memory_space<vmem>>, vector<8x128xf32>
    %c0_1 = arith.constant 0 : index
    %c0_2 = arith.constant 0 : index
    %1 = vector.load %arg2[%c0_1, %c0_2] : memref<8x128xf32, #tpu.memory_space<vmem>>, vector<8x128xf32>
    %c0_3 = arith.constant 0 : index
    %c0_4 = arith.constant 0 : index
    %2 = vector.load %arg3[%c0_3, %c0_4] : memref<128x128xf32, #tpu.memory_space<vmem>>, vector<128x128xf32>
    %c0_5 = arith.constant 0 : index
    %c0_6 = arith.constant 0 : index
    %3 = vector.load %arg4[%c0_5, %c0_6] : memref<1x128xf32, #tpu.memory_space<vmem>>, vector<1x128xf32>
    %c0_7 = arith.constant 0 : index
    %c0_8 = arith.constant 0 : index
    %4 = vector.load %arg5[%c0_7, %c0_8] : memref<1x128xf32, #tpu.memory_space<vmem>>, vector<1x128xf32>
    %cst = arith.constant dense<0.000000e+00> : vector<8x128xf32>
    %5 = tpu.matmul %0, %2, %cst {dimension_numbers = #tpu.dot_dimension_numbers<[1], [0], [0], [1], [0, 0, 1, 1], [], []>} : vector<8x128xf32>, vector<128x128xf32>, vector<8x128xf32> -> vector<8x128xf32>
    %cst_9 = arith.constant 1.250000e-01 : f32
    %6 = vector.broadcast %cst_9 : f32 to vector<8x128xf32>
    %7 = arith.mulf %5, %6 : vector<8x128xf32>
    %8 = arith.subf %0, %7 : vector<8x128xf32>
    %9 = arith.mulf %8, %8 : vector<8x128xf32>
    %cst_10 = arith.constant dense<0.000000e+00> : vector<8x128xf32>
    %10 = tpu.matmul %9, %2, %cst_10 {dimension_numbers = #tpu.dot_dimension_numbers<[1], [0], [0], [1], [0, 0, 1, 1], [], []>} : vector<8x128xf32>, vector<128x128xf32>, vector<8x128xf32> -> vector<8x128xf32>
    %cst_11 = arith.constant 1.250000e-01 : f32
    %11 = vector.broadcast %cst_11 : f32 to vector<8x128xf32>
    %12 = arith.mulf %10, %11 : vector<8x128xf32>
    %cst_12 = arith.constant 9.99999974E-6 : f32
    %13 = vector.broadcast %cst_12 : f32 to vector<8x128xf32>
    %14 = arith.addf %12, %13 : vector<8x128xf32>
    %15 = math.rsqrt %14 : vector<8x128xf32>
    %16 = arith.mulf %8, %15 : vector<8x128xf32>
    %17 = vector.broadcast %3 : vector<1x128xf32> to vector<8x128xf32>
    %18 = arith.mulf %16, %17 : vector<8x128xf32>
    %19 = vector.broadcast %4 : vector<1x128xf32> to vector<8x128xf32>
    %20 = arith.addf %18, %19 : vector<8x128xf32>
    %c0_13 = arith.constant 0 : index
    %c0_14 = arith.constant 0 : index
    %21 = vector.load %arg6[%c0_13, %c0_14] : memref<1x128xf32, #tpu.memory_space<vmem>>, vector<1x128xf32>
    %c0_15 = arith.constant 0 : index
    %c0_16 = arith.constant 0 : index
    %22 = vector.load %arg7[%c0_15, %c0_16] : memref<1x128xf32, #tpu.memory_space<vmem>>, vector<1x128xf32>
    %cst_17 = arith.constant dense<0.000000e+00> : vector<8x128xf32>
    %23 = tpu.matmul %1, %2, %cst_17 {dimension_numbers = #tpu.dot_dimension_numbers<[1], [0], [0], [1], [0, 0, 1, 1], [], []>} : vector<8x128xf32>, vector<128x128xf32>, vector<8x128xf32> -> vector<8x128xf32>
    %cst_18 = arith.constant 1.250000e-01 : f32
    %24 = vector.broadcast %cst_18 : f32 to vector<8x128xf32>
    %25 = arith.mulf %23, %24 : vector<8x128xf32>
    %26 = arith.subf %1, %25 : vector<8x128xf32>
    %27 = arith.mulf %26, %26 : vector<8x128xf32>
    %cst_19 = arith.constant dense<0.000000e+00> : vector<8x128xf32>
    %28 = tpu.matmul %27, %2, %cst_19 {dimension_numbers = #tpu.dot_dimension_numbers<[1], [0], [0], [1], [0, 0, 1, 1], [], []>} : vector<8x128xf32>, vector<128x128xf32>, vector<8x128xf32> -> vector<8x128xf32>
    %cst_20 = arith.constant 1.250000e-01 : f32
    %29 = vector.broadcast %cst_20 : f32 to vector<8x128xf32>
    %30 = arith.mulf %28, %29 : vector<8x128xf32>
    %cst_21 = arith.constant 9.99999974E-6 : f32
    %31 = vector.broadcast %cst_21 : f32 to vector<8x128xf32>
    %32 = arith.addf %30, %31 : vector<8x128xf32>
    %33 = math.rsqrt %32 : vector<8x128xf32>
    %34 = arith.mulf %26, %33 : vector<8x128xf32>
    %35 = vector.broadcast %21 : vector<1x128xf32> to vector<8x128xf32>
    %36 = arith.mulf %34, %35 : vector<8x128xf32>
    %37 = vector.broadcast %22 : vector<1x128xf32> to vector<8x128xf32>
    %38 = arith.addf %36, %37 : vector<8x128xf32>
    %39 = arith.addf %20, %38 : vector<8x128xf32>
    %c0_22 = arith.constant 0 : index
    %c0_23 = arith.constant 0 : index
    %40 = vector.load %arg8[%c0_22, %c0_23] : memref<1x128xf32, #tpu.memory_space<vmem>>, vector<1x128xf32>
    %41 = vector.broadcast %40 : vector<1x128xf32> to vector<8x128xf32>
    %42 = arith.mulf %39, %41 : vector<8x128xf32>
    %cst_24 = arith.constant dense<0.000000e+00> : vector<8xf32>
    %43 = vector.multi_reduction <add>, %42, %cst_24 [1] : vector<8x128xf32> to vector<8xf32>
    %44 = vector.shape_cast %43 : vector<8xf32> to vector<8x1xf32>
    %c0_25 = arith.constant 0 : index
    %45 = memref.load %arg9[%c0_25] : memref<1xf32, #tpu.memory_space<smem>>
    %46 = vector.broadcast %45 : f32 to vector<8x1xf32>
    %47 = arith.addf %44, %46 : vector<8x1xf32>
    %cst_26 = arith.constant 0.000000e+00 : f32
    %48 = vector.broadcast %cst_26 : f32 to vector<8x1xf32>
    %49 = arith.subf %48, %47 : vector<8x1xf32>
    %50 = math.exp %49 : vector<8x1xf32>
    %cst_27 = arith.constant 1.000000e+00 : f32
    %51 = vector.broadcast %cst_27 : f32 to vector<8x1xf32>
    %52 = arith.addf %51, %50 : vector<8x1xf32>
    %cst_28 = arith.constant 1.000000e+00 : f32
    %53 = vector.broadcast %cst_28 : f32 to vector<8x1xf32>
    %54 = arith.divf %53, %52 : vector<8x1xf32>
    %55 = arith.subf %38, %20 : vector<8x128xf32>
    %56 = vector.broadcast %54 : vector<8x1xf32> to vector<8x128xf32>
    %57 = arith.mulf %56, %55 : vector<8x128xf32>
    %58 = arith.addf %20, %57 : vector<8x128xf32>
    %c0_29 = arith.constant 0 : index
    %c0_30 = arith.constant 0 : index
    %59 = vector.load %arg10[%c0_29, %c0_30] : memref<8x128xf32, #tpu.memory_space<vmem>>, vector<8x128xf32>
    tpu.vector_store %arg10[%c0_29, %c0_30], %58 {strides = array<i32>} : memref<8x128xf32, #tpu.memory_space<vmem>>, vector<8x128xf32>,
    %c0_31 = arith.constant 0 : index
    %c0_32 = arith.constant 0 : index
    %60 = vector.load %arg11[%c0_31, %c0_32] : memref<8x1xf32, #tpu.memory_space<vmem>>, vector<8x1xf32>
    tpu.vector_store %arg11[%c0_31, %c0_32], %54 {strides = array<i32>} : memref<8x1xf32, #tpu.memory_space<vmem>>, vector<8x1xf32>,
    return
  }
  func.func @transform_0(%arg0: i32) -> (i32, i32) {
    %c0_i32 = arith.constant 0 : i32
    %c0_i32_0 = arith.constant 0 : i32
    return %arg0, %c0_i32 : i32, i32
  }
  func.func @transform_1(%arg0: i32) -> (i32, i32) {
    %c0_i32 = arith.constant 0 : i32
    %c0_i32_0 = arith.constant 0 : i32
    return %arg0, %c0_i32 : i32, i32
  }
  func.func @transform_2(%arg0: i32) -> (i32, i32) {
    %c0_i32 = arith.constant 0 : i32
    %c0_i32_0 = arith.constant 0 : i32
    %c0_i32_1 = arith.constant 0 : i32
    return %c0_i32, %c0_i32_0 : i32, i32
  }
  func.func @transform_3(%arg0: i32) -> (i32, i32) {
    %c0_i32 = arith.constant 0 : i32
    %c0_i32_0 = arith.constant 0 : i32
    %c0_i32_1 = arith.constant 0 : i32
    return %c0_i32, %c0_i32_0 : i32, i32
  }
  func.func @transform_4(%arg0: i32) -> (i32, i32) {
    %c0_i32 = arith.constant 0 : i32
    %c0_i32_0 = arith.constant 0 : i32
    %c0_i32_1 = arith.constant 0 : i32
    return %c0_i32, %c0_i32_0 : i32, i32
  }
  func.func @transform_5(%arg0: i32) -> (i32, i32) {
    %c0_i32 = arith.constant 0 : i32
    %c0_i32_0 = arith.constant 0 : i32
    %c0_i32_1 = arith.constant 0 : i32
    return %c0_i32, %c0_i32_0 : i32, i32
  }
  func.func @transform_6(%arg0: i32) -> (i32, i32) {
    %c0_i32 = arith.constant 0 : i32
    %c0_i32_0 = arith.constant 0 : i32
    %c0_i32_1 = arith.constant 0 : i32
    return %c0_i32, %c0_i32_0 : i32, i32
  }
  func.func @transform_7(%arg0: i32) -> (i32, i32) {
    %c0_i32 = arith.constant 0 : i32
    %c0_i32_0 = arith.constant 0 : i32
    %c0_i32_1 = arith.constant 0 : i32
    return %c0_i32, %c0_i32_0 : i32, i32
  }
  func.func @transform_8(%arg0: i32) -> i32 {
    %c0_i32 = arith.constant 0 : i32
    %c0_i32_0 = arith.constant 0 : i32
    return %c0_i32 : i32
  }
  func.func @transform_9(%arg0: i32) -> (i32, i32) {
    %c0_i32 = arith.constant 0 : i32
    %c0_i32_0 = arith.constant 0 : i32
    return %arg0, %c0_i32 : i32, i32
  }
  func.func @transform_10(%arg0: i32) -> (i32, i32) {
    %c0_i32 = arith.constant 0 : i32
    %c0_i32_0 = arith.constant 0 : i32
    return %arg0, %c0_i32 : i32, i32
  }
}

</mosaic_0001>

<llo_original>
// kernel: tpu_custom_call.1
$region0: #{tpu_custom_call.1}
  #allocation0 [shape = 'u32[]', space=smem, size = 0x4, offset = 0x4, fixed_abs, tag = 'smem constant byte address 0x4 - core index']
  #allocation1 [shape = 'u32[72,128]{1,0:T(1,128)}', space=vmem, size = 0x9000, scoped, tag = 'internal scratch']
  #allocation2 [shape = 'f32[1]{0:T(128)S(6)}', space=smem, size = 0x200, scoped, tag = 'scoped memory for tpu_custom_call.1']
  %s0 = inlined_call_operand.hbm [shape: f32[8,128], index: 0, kind: input, shape index: {}]
  %s1 = inlined_call_operand.hbm [shape: f32[8,128], index: 1, kind: input, shape index: {}]
  %s2 = inlined_call_operand.hbm [shape: f32[128,128], index: 2, kind: input, shape index: {}]
  %s3 = inlined_call_operand.vmem [shape: f32[1,128], index: 3, kind: input, shape index: {}]
  %s4 = inlined_call_operand.vmem [shape: f32[1,128], index: 4, kind: input, shape index: {}]
  %s5 = inlined_call_operand.vmem [shape: f32[1,128], index: 5, kind: input, shape index: {}]
  %s6 = inlined_call_operand.vmem [shape: f32[1,128], index: 6, kind: input, shape index: {}]
  %s7 = inlined_call_operand.vmem [shape: f32[1,128], index: 7, kind: input, shape index: {}]
  %s8 = inlined_call_operand.<no memory space> [shape: f32[1], index: 8, kind: input, shape index: {}]
  %s9 = inlined_call_operand.hbm [shape: f32[8,128], index: 9, kind: output, shape index: {0}]
  %s10 = inlined_call_operand.vmem [shape: f32[8,1], index: 10, kind: output, shape index: {1}]
  %11 = xla_tuple %s9, %s10
  %s12 = sld [smem:[#allocation0]]
  $region66: #{tpu_custom_call.1} parent=0
    _
  %s14 = ssub.s32 1, %s12
  %s15 = scalar_select 0, %s14, %s12
  %16 = sst [smem:[#allocation2]] %s8
  $region1: #{tpu_custom_call.1} parent=0
    #allocation3 [shape = 'u8[4096]{0}', space=vmem, size = 0x1000, scoped, tag = 'input window, operand 0, single buffered']
    #allocation4 [shape = 's32[1]{0}', space=sflag, size = 0x4, scoped, tag = 'scoped memory for tpu_custom_call.1']
    #allocation5 [shape = 's32[1]{0}', space=sflag, size = 0x4, scoped, tag = 'scoped memory for tpu_custom_call.1']
    #allocation6 [shape = 'u8[4096]{0}', space=vmem, size = 0x1000, scoped, tag = 'input window, operand 1, single buffered']
    #allocation7 [shape = 's32[1]{0}', space=sflag, size = 0x4, scoped, tag = 'scoped memory for tpu_custom_call.1']
    #allocation8 [shape = 'u8[65536]{0}', space=vmem, size = 0x10000, scoped, tag = 'input window, operand 2, single buffered']
    #allocation9 [shape = 'u8[4096]{0}', space=vmem, size = 0x1000, scoped, tag = 'output window, operand 0, single buffered']
    %17 = vsyncpa [#allocation4], 0
    %18 = vsyncpa [#allocation7], 0
    %19 = vsyncpa [#allocation5], 0
    // Predicated region
    $region2: #{tpu_custom_call.1} parent=1 // pred_check
      _
    $region3: #{tpu_custom_call.1} parent=1 // pred_check_branch
      %21 = sbr.rel (0) target = $region5
    $region4: #{tpu_custom_call.1} parent=1 // pred_region
      %23 = vsyncadd [#allocation4], 0
      %s25 = sshll.u32 %s0, 4
      %s26 = int_to_ptr.hbm [resolvable:$true] %s25
      %s27 = sshll.u32 [#allocation3], 4
      %s28 = int_to_ptr.vmem [resolvable:$true] %s27
      %30 = dma.hbm_to_vmem [thread:$0]  %s26, 128, %s28, [#allocation4]
    $region5: #{tpu_custom_call.1} parent=1 // pred_fallthru
      _
    // Predicated region
    $region6: #{tpu_custom_call.1} parent=1 // pred_check
      _
    $region7: #{tpu_custom_call.1} parent=1 // pred_check_branch
      %32 = sbr.rel (0) target = $region9
    $region8: #{tpu_custom_call.1} parent=1 // pred_region
      %34 = vsyncadd [#allocation7], 0
      %s36 = sshll.u32 %s1, 4
      %s37 = int_to_ptr.hbm [resolvable:$true] %s36
      %s38 = sshll.u32 [#allocation6], 4
      %s39 = int_to_ptr.vmem [resolvable:$true] %s38
      %41 = dma.hbm_to_vmem [thread:$0]  %s37, 128, %s39, [#allocation7]
    $region9: #{tpu_custom_call.1} parent=1 // pred_fallthru
      _
    // Predicated region
    $region10: #{tpu_custom_call.1} parent=1 // pred_check
      _
    $region11: #{tpu_custom_call.1} parent=1 // pred_check_branch
      %43 = sbr.rel (0) target = $region13
    $region12: #{tpu_custom_call.1} parent=1 // pred_region
      %45 = vsyncadd [#allocation7], 0
      %s46 = sshll.u32 %s2, 4
      %s47 = int_to_ptr.hbm [resolvable:$true] %s46
      %s48 = sshll.u32 [#allocation8], 4
      %s49 = int_to_ptr.vmem [resolvable:$true] %s48
      %54 = dma.hbm_to_vmem [thread:$0]  %s47, 2048, %s49, [#allocation7], 128, 128, 8
    $region13: #{tpu_custom_call.1} parent=1 // pred_fallthru
      _
    // Predicated region
    $region14: #{tpu_custom_call.1} parent=1 // pred_check
      _
    $region15: #{tpu_custom_call.1} parent=1 // pred_check_branch
      %56 = sbr.rel (0) target = $region17
    $region16: #{tpu_custom_call.1} parent=1 // pred_region
      _
    $region17: #{tpu_custom_call.1} parent=1 // pred_fallthru
      _
    // Predicated region
    $region18: #{tpu_custom_call.1} parent=1 // pred_check
      _
    $region19: #{tpu_custom_call.1} parent=1 // pred_check_branch
      %58 = sbr.rel (0) target = $region21
    $region20: #{tpu_custom_call.1} parent=1 // pred_region
      _
    $region21: #{tpu_custom_call.1} parent=1 // pred_fallthru
      _
    // Predicated region
    $region22: #{tpu_custom_call.1} parent=1 // pred_check
      _
    $region23: #{tpu_custom_call.1} parent=1 // pred_check_branch
      %60 = sbr.rel (0) target = $region25
    $region24: #{tpu_custom_call.1} parent=1 // pred_region
      _
    $region25: #{tpu_custom_call.1} parent=1 // pred_fallthru
      _
    // Predicated region
    $region26: #{tpu_custom_call.1} parent=1 // pred_check
      _
    $region27: #{tpu_custom_call.1} parent=1 // pred_check_branch
      %62 = sbr.rel (0) target = $region29
    $region28: #{tpu_custom_call.1} parent=1 // pred_region
      _
    $region29: #{tpu_custom_call.1} parent=1 // pred_fallthru
      _
    // Predicated region
    $region30: #{tpu_custom_call.1} parent=1 // pred_check
      _
    $region31: #{tpu_custom_call.1} parent=1 // pred_check_branch
      %64 = sbr.rel (0) target = $region33
    $region32: #{tpu_custom_call.1} parent=1 // pred_region
      _
    $region33: #{tpu_custom_call.1} parent=1 // pred_fallthru
      _
    // Predicated region
    $region34: #{tpu_custom_call.1} parent=1 // pred_check
      _
    $region35: #{tpu_custom_call.1} parent=1 // pred_check_branch
      %66 = sbr.rel (0) target = $region37
    $region36: #{tpu_custom_call.1} parent=1 // pred_region
      _
    $region37: #{tpu_custom_call.1} parent=1 // pred_fallthru
      _
    // Predicated region
    $region38: #{tpu_custom_call.1} parent=1 // pred_check
      _
    $region39: #{tpu_custom_call.1} parent=1 // pred_check_branch
      %68 = sbr.rel (0) target = $region41
    $region40: #{tpu_custom_call.1} parent=1 // pred_region
      %70 = dma.done [#allocation4], 128
    $region41: #{tpu_custom_call.1} parent=1 // pred_fallthru
      _
    // Predicated region
    $region42: #{tpu_custom_call.1} parent=1 // pred_check
      _
    $region43: #{tpu_custom_call.1} parent=1 // pred_check_branch
      %72 = sbr.rel (0) target = $region45
    $region44: #{tpu_custom_call.1} parent=1 // pred_region
      %74 = dma.done [#allocation7], 128
    $region45: #{tpu_custom_call.1} parent=1 // pred_fallthru
      _
    // Predicated region
    $region46: #{tpu_custom_call.1} parent=1 // pred_check
      _
    $region47: #{tpu_custom_call.1} parent=1 // pred_check_branch
      %76 = sbr.rel (0) target = $region49
    $region48: #{tpu_custom_call.1} parent=1 // pred_region
      %78 = dma.done [#allocation7], 2048
    $region49: #{tpu_custom_call.1} parent=1 // pred_fallthru
      _
    %v79 = vld [vmem:[#allocation3] sm:$0xff]
    %v80 = vld [vmem:[#allocation6] sm:$0xff]
    %v81 = vld [vmem:[#allocation8] sm:$0xff]
    %v82 = vld [vmem:[#allocation8 + $0x8] sm:$0xff]
    %v83 = vld [vmem:[#allocation8 + $0x10] sm:$0xff]
    %v84 = vld [vmem:[#allocation8 + $0x18] sm:$0xff]
    %v85 = vld [vmem:[#allocation8 + $0x20] sm:$0xff]
    %v86 = vld [vmem:[#allocation8 + $0x28] sm:$0xff]
    %v87 = vld [vmem:[#allocation8 + $0x30] sm:$0xff]
    %v88 = vld [vmem:[#allocation8 + $0x38] sm:$0xff]
    %v89 = vld [vmem:[#allocation8 + $0x40] sm:$0xff]
    %v90 = vld [vmem:[#allocation8 + $0x48] sm:$0xff]
    %v91 = vld [vmem:[#allocation8 + $0x50] sm:$0xff]
    %v92 = vld [vmem:[#allocation8 + $0x58] sm:$0xff]
    %v93 = vld [vmem:[#allocation8 + $0x60] sm:$0xff]
    %v94 = vld [vmem:[#allocation8 + $0x68] sm:$0xff]
    %v95 = vld [vmem:[#allocation8 + $0x70] sm:$0xff]
    %v96 = vld [vmem:[#allocation8 + $0x78] sm:$0xff]
    %v97 = vld [vmem:[%s3] sm:$0x1]
    %v98 = vld [vmem:[%s4] sm:$0x1]
    %99 = vmatpush.msra.mxu0 %v96
    %100 = vmatpush.msra.mxu0 %v95
    %101 = vmatpush.msra.mxu0 %v94
    %102 = vmatpush.msra.mxu0 %v93
    %103 = vmatpush.msra.mxu0 %v92
    %104 = vmatpush.msra.mxu0 %v91
    %105 = vmatpush.msra.mxu0 %v90
    %106 = vmatpush.msra.mxu0 %v89
    %107 = vmatpush.msra.mxu0 %v88
    %108 = vmatpush.msra.mxu0 %v87
    %109 = vmatpush.msra.mxu0 %v86
    %110 = vmatpush.msra.mxu0 %v85
    %111 = vmatpush.msra.mxu0 %v84
    %112 = vmatpush.msra.mxu0 %v83
    %113 = vmatpush.msra.mxu0 %v82
    %114 = vmatpush.msra.mxu0 %v81
    %115 = vmatmul.f32.gmra.mxu0 %v79
    %v116 = vpop.f32.mrf.mxu0
    %v117 = vadd.f32 0.0, %v116
    %118 = vdwg.mxu0
    %v119 = vmul.f32 %v117, 0.125
    %v120 = vsub.f32 %v79, %v119
    %v121 = vmul.f32 %v120, %v120
    %122 = vmatpush.msra.mxu0 %v96
    %123 = vmatpush.msra.mxu0 %v95
    %124 = vmatpush.msra.mxu0 %v94
    %125 = vmatpush.msra.mxu0 %v93
    %126 = vmatpush.msra.mxu0 %v92
    %127 = vmatpush.msra.mxu0 %v91
    %128 = vmatpush.msra.mxu0 %v90
    %129 = vmatpush.msra.mxu0 %v89
    %130 = vmatpush.msra.mxu0 %v88
    %131 = vmatpush.msra.mxu0 %v87
    %132 = vmatpush.msra.mxu0 %v86
    %133 = vmatpush.msra.mxu0 %v85
    %134 = vmatpush.msra.mxu0 %v84
    %135 = vmatpush.msra.mxu0 %v83
    %136 = vmatpush.msra.mxu0 %v82
    %137 = vmatpush.msra.mxu0 %v81
    %138 = vmatmul.f32.gmra.mxu0 %v121
    %v139 = vpop.f32.mrf.mxu0
    %v140 = vadd.f32 0.0, %v139
    %141 = vdwg.mxu0
    %v142 = vmul.f32 %v140, 0.125
    %v143 = vadd.f32 %v142, 1e-05
    %v144 = vrsqrt.pop %v143
    %v145 = vmul.f32 %v144, %v143
    %v146 = vmul.f32 %v145, %v144
    %v147 = vmul.f32 0.5, %v146
    %v148 = vsub.f32 1.5, %v147
    %v149 = vmul.f32 %v144, %v148
    %vm150 = vweird.f32 %v143
    %vm151 = vweird.f32 %v144
    %vm152 = vmor %vm150, %vm151
    %v153 = vsel %vm152, %v144, %v149
    %v154 = vmul.f32 %v120, %v153
    %v156 = vperm.slane %v97, 0
    %v158 = vmul.f32 %v154, %v156
    %v160 = vperm.slane %v98, 0
    %v162 = vadd.f32 %v158, %v160
    %v163 = vld [vmem:[%s5] sm:$0x1]
    %v164 = vld [vmem:[%s6] sm:$0x1]
    %165 = vmatpush.msra.mxu0 %v96
    %166 = vmatpush.msra.mxu0 %v95
    %167 = vmatpush.msra.mxu0 %v94
    %168 = vmatpush.msra.mxu0 %v93
    %169 = vmatpush.msra.mxu0 %v92
    %170 = vmatpush.msra.mxu0 %v91
    %171 = vmatpush.msra.mxu0 %v90
    %172 = vmatpush.msra.mxu0 %v89
    %173 = vmatpush.msra.mxu0 %v88
    %174 = vmatpush.msra.mxu0 %v87
    %175 = vmatpush.msra.mxu0 %v86
    %176 = vmatpush.msra.mxu0 %v85
    %177 = vmatpush.msra.mxu0 %v84
    %178 = vmatpush.msra.mxu0 %v83
    %179 = vmatpush.msra.mxu0 %v82
    %180 = vmatpush.msra.mxu0 %v81
    %181 = vmatmul.f32.gmra.mxu0 %v80
    %v182 = vpop.f32.mrf.mxu0
    %v183 = vadd.f32 0.0, %v182
    %184 = vdwg.mxu0
    %v185 = vmul.f32 %v183, 0.125
    %v186 = vsub.f32 %v80, %v185
    %v187 = vmul.f32 %v186, %v186
    %188 = vmatpush.msra.mxu0 %v96
    %189 = vmatpush.msra.mxu0 %v95
    %190 = vmatpush.msra.mxu0 %v94
    %191 = vmatpush.msra.mxu0 %v93
    %192 = vmatpush.msra.mxu0 %v92
    %193 = vmatpush.msra.mxu0 %v91
    %194 = vmatpush.msra.mxu0 %v90
    %195 = vmatpush.msra.mxu0 %v89
    %196 = vmatpush.msra.mxu0 %v88
    %197 = vmatpush.msra.mxu0 %v87
    %198 = vmatpush.msra.mxu0 %v86
    %199 = vmatpush.msra.mxu0 %v85
    %200 = vmatpush.msra.mxu0 %v84
    %201 = vmatpush.msra.mxu0 %v83
    %202 = vmatpush.msra.mxu0 %v82
    %203 = vmatpush.msra.mxu0 %v81
    %204 = vmatmul.f32.gmra.mxu0 %v187
    %v205 = vpop.f32.mrf.mxu0
    %v206 = vadd.f32 0.0, %v205
    %207 = vdwg.mxu0
    %v208 = vmul.f32 %v206, 0.125
    %v209 = vadd.f32 %v208, 1e-05
    %v210 = vrsqrt.pop %v209
    %v211 = vmul.f32 %v210, %v209
    %v212 = vmul.f32 %v211, %v210
    %v213 = vmul.f32 0.5, %v212
    %v214 = vsub.f32 1.5, %v213
    %v215 = vmul.f32 %v210, %v214
    %vm216 = vweird.f32 %v209
    %vm217 = vweird.f32 %v210
    %vm218 = vmor %vm216, %vm217
    %v219 = vsel %vm218, %v210, %v215
    %v220 = vmul.f32 %v186, %v219
    %v222 = vperm.slane %v163, 0
    %v224 = vmul.f32 %v220, %v222
    %v226 = vperm.slane %v164, 0
    %v228 = vadd.f32 %v224, %v226
    %v229 = vadd.f32 %v162, %v228
    %v230 = vld [vmem:[%s7] sm:$0x1]
    %v232 = vperm.slane %v230, 0
    %v234 = vmul.f32 %v229, %v232
    %235 = vadd.xlane.f32.xlu0 %v234
    %v236 = vpop.xlane.xlu0 %235
    %s237 = sld [smem:[#allocation2]]
    %v238 = vstv %s237
    %v239 = vadd.f32 %v236, %v238
    %v240 = vsub.f32 0.0, %v239
    %v241 = vmul.f32 %v240, 1.442695
    %v242 = vpow.pop %v241
    %v243 = vadd.f32 %v242, 1.0
    %v244 = vrcp.pop %v243
    %v245 = vmul.f32 %v243, %v244
    %v246 = vsub.f32 1.0, %v245
    %v247 = vmul.f32 %v244, %v246
    %v248 = vadd.f32 %v244, %v247
    %vm249 = vweird.f32 %v243
    %vm250 = vweird.f32 %v244
    %vm251 = vmor %vm249, %vm250
    %v252 = vsel %vm251, %v244, %v248
    %v253 = vand.u32 2147483647, %v243
    %vm254 = vcmp.eq.f32.partialorder %v253, 8.507059e+37
    %v255 = vand.u32 %v243, 2147483648
    %v256 = vor.u32 1.1754944e-38, %v255
    %v257 = vsel %vm254, %v256, %v252
    %v258 = vmul.f32 1.0, %v257
    %v259 = vsub.f32 %v228, %v162
    %v260 = vmul.f32 %v258, %v259
    %v261 = vadd.f32 %v162, %v260
    %262 = vst [vmem:[#allocation9] sm:$0xff] %v261
    %vm263 = vcmask 7168
    %264 = vst.msk [vmem:[%s10] sm:$0xff] %vm263, %v258
    // Predicated region
    $region50: #{tpu_custom_call.1} parent=1 // pred_check
      _
    $region51: #{tpu_custom_call.1} parent=1 // pred_check_branch
      %266 = sbr.rel (0) target = $region53
    $region52: #{tpu_custom_call.1} parent=1 // pred_region
      %268 = vsyncadd [#allocation5], 0
      %s270 = sshll.u32 [#allocation9], 4
      %s271 = int_to_ptr.vmem [resolvable:$true] %s270
      %s272 = sshll.u32 %s9, 4
      %s273 = int_to_ptr.hbm [resolvable:$true] %s272
      %275 = dma.vmem_to_hbm [thread:$0]  %s271, 128, %s273, [#allocation5]
    $region53: #{tpu_custom_call.1} parent=1 // pred_fallthru
      _
    // Predicated region
    $region54: #{tpu_custom_call.1} parent=1 // pred_check
      _
    $region55: #{tpu_custom_call.1} parent=1 // pred_check_branch
      %277 = sbr.rel (0) target = $region57
    $region56: #{tpu_custom_call.1} parent=1 // pred_region
      _
    $region57: #{tpu_custom_call.1} parent=1 // pred_fallthru
      _
    // Predicated region
    $region58: #{tpu_custom_call.1} parent=1 // pred_check
      _
    $region59: #{tpu_custom_call.1} parent=1 // pred_check_branch
      %279 = sbr.rel (0) target = $region61
    $region60: #{tpu_custom_call.1} parent=1 // pred_region
      %281 = dma.done [#allocation5], 128
    $region61: #{tpu_custom_call.1} parent=1 // pred_fallthru
      _
    // Predicated region
    $region62: #{tpu_custom_call.1} parent=1 // pred_check
      _
    $region63: #{tpu_custom_call.1} parent=1 // pred_check_branch
      %283 = sbr.rel (0) target = $region65
    $region64: #{tpu_custom_call.1} parent=1 // pred_region
      _
    $region65: #{tpu_custom_call.1} parent=1 // pred_fallthru
      _
    %284 = vsyncpa [#allocation4], 1
    %285 = vsyncpa [#allocation7], 1
    %286 = vsyncpa [#allocation5], 1

</llo_original>
